<compile_context>
chip_gen: v7x
topology: tpu7x:2x2x1
jax: 0.10.0
libtpu: 0.0.40
codegen_flags: <defaults>
</compile_context>

<pallas_src>
import functools

import jax
import jax.numpy as jnp
from jax.experimental import pallas as pl
from jax.experimental.pallas import tpu as pltpu

EPS = 1e-7


# -------------------- LayerNorm kernel --------------------
def _layernorm_kernel(x_ref, g_ref, b_ref, o_ref, *, eps, n):
    x = x_ref[...].astype(jnp.float32)                        # (TR, D)
    # One-pass statistics: the two reductions are independent and no (TR, D)
    # centered temporary is needed before the stats are known.
    s1 = jnp.sum(x, axis=-1, keepdims=True)                   # (TR, 1)
    s2 = jnp.sum(x * x, axis=-1, keepdims=True)               # (TR, 1)
    mean = s1 * jnp.float32(1.0 / n)
    # torch.std() default: unbiased estimator, divide by (D - 1).  The
    # one-pass form can go slightly negative from rounding -> clamp at 0.
    var = (s2 - s1 * mean) * jnp.float32(1.0 / (n - 1))
    std = jnp.sqrt(jnp.maximum(var, jnp.float32(0.0)))
    # Per-row reciprocal (EUP path) -> only TR reciprocals, then VPU multiplies.
    inv = pl.reciprocal(std + jnp.float32(eps), approx=False)
    y = g_ref[...].astype(jnp.float32) * ((x - mean) * inv) \
        + b_ref[...].astype(jnp.float32)
    o_ref[...] = y.astype(o_ref.dtype)


# -------------------- tiling helpers --------------------
def _physical_vmem_bytes():
    """Per-core VMEM capacity; conservative fallback (v7x: 64 MiB per TC)."""
    try:
        cap = getattr(pltpu.get_tpu_info(), "vmem_capacity_bytes", None)
        if cap:
            return int(cap)
    except Exception:
        pass
    return 64 << 20


def _sublane_rows(itemsize):
    """Rows per packed sublane group: 8 for 4B, 16 for 2B, 32 for 1B dtypes."""
    return max(8, 32 // max(int(itemsize), 1))


def _row_tile(n_rows, d, itemsize, vmem_budget):
    """Rows per grid step, sized against an explicit VMEM working-set budget.

    Per-row cost model: 2x double-buffered input block + 2x double-buffered
    output block (native dtype) + ~4 f32-wide (TR, D) in-kernel temporaries
    (f32 upcast of x, x*x, x - mean, y before the output cast).
    """
    per_row = d * (4 * itemsize + 4 * 4)
    tr = max(1, int(vmem_budget) // per_row)
    if tr >= n_rows:
        return n_rows                              # full-extent block: always legal
    sub = _sublane_rows(itemsize)
    tr = max(sub, (tr // sub) * sub)
    return min(tr, n_rows)


# -------------------- public wrapper --------------------
def layer_norm(x, gamma, beta, eps=EPS):
    """LayerNorm over the last dim of x (any leading shape), torch.std semantics."""
    orig_shape = x.shape
    D = orig_shape[-1]

    # The last dim maps to the 128-wide lane axis; D not a multiple of 128
    # would emit masked partial stores and cap this HBM-bound kernel at
    # ~D/128 of roofline, so fall back to plain XLA for those shapes.
    # TODO(synk): for hot small-D shapes, pack 128 // D rows into the lane
    # axis with a segmented reduction instead of falling back.
    if D % 128 != 0:
        mean = jnp.mean(x, axis=-1, keepdims=True)
        var = jnp.sum((x - mean) ** 2, axis=-1, keepdims=True) / (D - 1)
        std = jnp.sqrt(var)
        return gamma * (x - mean) / (std + eps) + beta

    x2d = x.reshape(-1, D)
    R = x2d.shape[0]
    itemsize = x2d.dtype.itemsize

    # Generation-aware VMEM budgeting: v5e/v6e have 128 MiB physical VMEM,
    # v7x has 64 MiB per TC.  Use ~5/8 of physical for the tile working set
    # (capped at 48 MiB) and raise the scoped limit so it compiles.
    cap = _physical_vmem_bytes()
    budget = min((cap * 5) // 8, 48 << 20)
    vmem_limit = int(min(cap, budget + (16 << 20)))

    tr = _row_tile(R, D, itemsize, budget)
    grid = (pl.cdiv(R, tr),)
    kernel = functools.partial(_layernorm_kernel, eps=float(eps), n=D)
    out2d = pl.pallas_call(
        kernel,
        out_shape=jax.ShapeDtypeStruct((R, D), x.dtype),
        grid=grid,
        in_specs=[
            pl.BlockSpec((tr, D), lambda i: (i, 0)),   # x rows: tiled, pipelined
            pl.BlockSpec((1, D), lambda i: (0, 0)),    # gamma: resident
            pl.BlockSpec((1, D), lambda i: (0, 0)),    # beta : resident
        ],
        out_specs=pl.BlockSpec((tr, D), lambda i: (i, 0)),
        compiler_params=pltpu.CompilerParams(
            dimension_semantics=("parallel",),         # v7x: shard rows over 2 TCs
            vmem_limit_bytes=vmem_limit),
    )(x2d, gamma.reshape(1, D), beta.reshape(1, D))
    return out2d.reshape(orig_shape)


# -------------------- reference (pure JAX) --------------------
def _reference(x, gamma, beta, eps=EPS):
    x = x.astype(jnp.float32)
    mean = jnp.mean(x, axis=-1, keepdims=True)
    var = jnp.sum((x - mean) ** 2, axis=-1, keepdims=True) / (x.shape[-1] - 1)
    std = jnp.sqrt(var)
    return (gamma.astype(jnp.float32) * (x - mean) / (std + eps)
            + beta.astype(jnp.float32))


if __name__ == "__main__":
    key = jax.random.PRNGKey(0)
    kx, kg, kb, kx2, kx3 = jax.random.split(key, 5)

    # 1) Small shape consistent with the module: (batch=2, seq=8, hidden=128).
    B, S, D = 2, 8, 128
    x = jax.random.normal(kx, (B, S, D), dtype=jnp.float32)
    gamma = 1.0 + 0.1 * jax.random.normal(kg, (D,), dtype=jnp.float32)
    beta = 0.05 * jax.random.normal(kb, (D,), dtype=jnp.float32)
    out = jax.block_until_ready(layer_norm(x, gamma, beta))
    ref = _reference(x, gamma, beta)
    assert jnp.allclose(out, ref, atol=1e-4, rtol=1e-4)

    # 2) hidden=32 (< 128): exercises the small-D XLA fallback path.
    Ds = 32
    xs = jax.random.normal(kx3, (2, 8, Ds), dtype=jnp.float32)
    gs = jnp.ones((Ds,), jnp.float32)
    bs = jnp.zeros((Ds,), jnp.float32)
    outs = jax.block_until_ready(layer_norm(xs, gs, bs))
    refs = _reference(xs, gs, bs)
    assert jnp.allclose(outs, refs, atol=1e-4, rtol=1e-4)

    # 3) Larger f32 case exercising the multi-tile (pipelined) grid path.
    B2, S2, D2 = 4, 2048, 256
    x2 = jax.random.normal(kx2, (B2, S2, D2), dtype=jnp.float32)
    g2 = 1.0 + 0.1 * jax.random.normal(kg, (D2,), dtype=jnp.float32)
    b2 = 0.05 * jax.random.normal(kb, (D2,), dtype=jnp.float32)
    out2 = jax.block_until_ready(layer_norm(x2, g2, b2))
    ref2 = _reference(x2, g2, b2)
    assert jnp.allclose(out2, ref2, atol=1e-4, rtol=1e-4)

    # 4) bf16 case: exercises dtype-aware sublane rounding and the output cast.
    x3 = jax.random.normal(kx, (4, 1024, 128), dtype=jnp.float32).astype(jnp.bfloat16)
    g3 = jnp.ones((128,), jnp.float32)
    b3 = jnp.zeros((128,), jnp.float32)
    out3 = jax.block_until_ready(layer_norm(x3, g3, b3))
    ref3 = _reference(x3.astype(jnp.float32), g3, b3).astype(jnp.bfloat16)
    assert jnp.allclose(out3.astype(jnp.float32), ref3.astype(jnp.float32),
                        atol=2e-2, rtol=2e-2)

    print("KERNEL_OK")
</pallas_src>

<mosaic_0001>
module attributes {stable_mosaic.version = 11 : i64} {
  func.func @_layernorm_kernel(%arg0: i32, %arg1: memref<16x128xf32, #tpu.memory_space<vmem>>, %arg2: memref<1x128xf32, #tpu.memory_space<vmem>>, %arg3: memref<1x128xf32, #tpu.memory_space<vmem>>, %arg4: memref<16x128xf32, #tpu.memory_space<vmem>>) attributes {dimension_semantics = [#tpu.dimension_semantics<parallel>], iteration_bounds = array<i64: 1>, scalar_prefetch = 0 : i64, scratch_operands = 0 : i64, tpu.core_type = #tpu.core_type<tc>, window_params = [{transform_indices = @transform_0, window_bounds = array<i64: 16, 128>}, {pipeline_mode = #tpu.pipeline_mode<synchronous>, transform_indices = @transform_1, window_bounds = array<i64: 1, 128>}, {pipeline_mode = #tpu.pipeline_mode<synchronous>, transform_indices = @transform_2, window_bounds = array<i64: 1, 128>}, {transform_indices = @transform_3, window_bounds = array<i64: 16, 128>}]} {
    %c0 = arith.constant 0 : index
    %c0_0 = arith.constant 0 : index
    %0 = vector.load %arg1[%c0, %c0_0] : memref<16x128xf32, #tpu.memory_space<vmem>>, vector<16x128xf32>
    %cst = arith.constant dense<0.000000e+00> : vector<16xf32>
    %1 = vector.multi_reduction <add>, %0, %cst [1] : vector<16x128xf32> to vector<16xf32>
    %2 = vector.shape_cast %1 : vector<16xf32> to vector<16x1xf32>
    %3 = arith.mulf %0, %0 : vector<16x128xf32>
    %cst_1 = arith.constant dense<0.000000e+00> : vector<16xf32>
    %4 = vector.multi_reduction <add>, %3, %cst_1 [1] : vector<16x128xf32> to vector<16xf32>
    %5 = vector.shape_cast %4 : vector<16xf32> to vector<16x1xf32>
    %cst_2 = arith.constant 7.812500e-03 : f32
    %6 = vector.broadcast %cst_2 : f32 to vector<16x1xf32>
    %7 = arith.mulf %2, %6 : vector<16x1xf32>
    %8 = arith.mulf %2, %7 : vector<16x1xf32>
    %9 = arith.subf %5, %8 : vector<16x1xf32>
    %cst_3 = arith.constant 0.00787401571 : f32
    %10 = vector.broadcast %cst_3 : f32 to vector<16x1xf32>
    %11 = arith.mulf %9, %10 : vector<16x1xf32>
    %cst_4 = arith.constant 0.000000e+00 : f32
    %12 = vector.broadcast %cst_4 : f32 to vector<16x1xf32>
    %13 = arith.maximumf %11, %12 : vector<16x1xf32>
    %14 = math.sqrt %13 : vector<16x1xf32>
    %cst_5 = arith.constant 1.000000e-07 : f32
    %15 = vector.broadcast %cst_5 : f32 to vector<16x1xf32>
    %16 = arith.addf %14, %15 : vector<16x1xf32>
    %17 = tpu.reciprocal %16 : vector<16x1xf32> -> vector<16x1xf32>
    %c0_6 = arith.constant 0 : index
    %c0_7 = arith.constant 0 : index
    %18 = vector.load %arg2[%c0_6, %c0_7] : memref<1x128xf32, #tpu.memory_space<vmem>>, vector<1x128xf32>
    %19 = vector.broadcast %7 : vector<16x1xf32> to vector<16x128xf32>
    %20 = arith.subf %0, %19 : vector<16x128xf32>
    %21 = vector.broadcast %17 : vector<16x1xf32> to vector<16x128xf32>
    %22 = arith.mulf %20, %21 : vector<16x128xf32>
    %23 = vector.broadcast %18 : vector<1x128xf32> to vector<16x128xf32>
    %24 = arith.mulf %23, %22 : vector<16x128xf32>
    %c0_8 = arith.constant 0 : index
    %c0_9 = arith.constant 0 : index
    %25 = vector.load %arg3[%c0_8, %c0_9] : memref<1x128xf32, #tpu.memory_space<vmem>>, vector<1x128xf32>
    %26 = vector.broadcast %25 : vector<1x128xf32> to vector<16x128xf32>
    %27 = arith.addf %24, %26 : vector<16x128xf32>
    %c0_10 = arith.constant 0 : index
    %c0_11 = arith.constant 0 : index
    %28 = vector.load %arg4[%c0_10, %c0_11] : memref<16x128xf32, #tpu.memory_space<vmem>>, vector<16x128xf32>
    tpu.vector_store %arg4[%c0_10, %c0_11], %27 {strides = array<i32>} : memref<16x128xf32, #tpu.memory_space<vmem>>, vector<16x128xf32>,
    return
  }
  func.func @transform_0(%arg0: i32) -> (i32, i32) {
    %c0_i32 = arith.constant 0 : i32
    %c0_i32_0 = arith.constant 0 : i32
    return %arg0, %c0_i32 : i32, i32
  }
  func.func @transform_1(%arg0: i32) -> (i32, i32) {
    %c0_i32 = arith.constant 0 : i32
    %c0_i32_0 = arith.constant 0 : i32
    %c0_i32_1 = arith.constant 0 : i32
    return %c0_i32, %c0_i32_0 : i32, i32
  }
  func.func @transform_2(%arg0: i32) -> (i32, i32) {
    %c0_i32 = arith.constant 0 : i32
    %c0_i32_0 = arith.constant 0 : i32
    %c0_i32_1 = arith.constant 0 : i32
    return %c0_i32, %c0_i32_0 : i32, i32
  }
  func.func @transform_3(%arg0: i32) -> (i32, i32) {
    %c0_i32 = arith.constant 0 : i32
    %c0_i32_0 = arith.constant 0 : i32
    return %arg0, %c0_i32 : i32, i32
  }
}

</mosaic_0001>

<llo_original>
// kernel: tpu_custom_call.1
$region0: #{tpu_custom_call.1}
  #allocation0 [shape = 'u32[]', space=smem, size = 0x4, offset = 0x4, fixed_abs, tag = 'smem constant byte address 0x4 - core index']
  #allocation1 [shape = 'u32[144,128]{1,0:T(1,128)}', space=vmem, size = 0x12000, scoped, tag = 'internal scratch']
  %s0 = inlined_call_operand.hbm [shape: f32[16,128], index: 0, kind: input, shape index: {}]
  %s1 = inlined_call_operand.vmem [shape: f32[1,128], index: 1, kind: input, shape index: {}]
  %s2 = inlined_call_operand.vmem [shape: f32[1,128], index: 2, kind: input, shape index: {}]
  %s3 = inlined_call_operand.hbm [shape: f32[16,128], index: 3, kind: output, shape index: {}]
  %s4 = sld [smem:[#allocation0]]
  $region26: #{tpu_custom_call.1} parent=0
    _
  %s6 = ssub.s32 1, %s4
  %s7 = scalar_select 0, %s6, %s4
  $region1: #{tpu_custom_call.1} parent=0
    #allocation2 [shape = 'u8[8192]{0}', space=vmem, size = 0x2000, scoped, tag = 'input window, operand 0, single buffered']
    #allocation3 [shape = 's32[1]{0}', space=sflag, size = 0x4, scoped, tag = 'scoped memory for tpu_custom_call.1']
    #allocation4 [shape = 's32[1]{0}', space=sflag, size = 0x4, scoped, tag = 'scoped memory for tpu_custom_call.1']
    #allocation5 [shape = 'u8[8192]{0}', space=vmem, size = 0x2000, scoped, tag = 'output window, operand 0, single buffered']
    %8 = vsyncpa [#allocation3], 0
    %9 = vsyncpa [#allocation4], 0
    // Predicated region
    $region2: #{tpu_custom_call.1} parent=1 // pred_check
      _
    $region3: #{tpu_custom_call.1} parent=1 // pred_check_branch
      %11 = sbr.rel (0) target = $region5
    $region4: #{tpu_custom_call.1} parent=1 // pred_region
      %s13 = ssub.s32 256, 256
      %14 = vsyncadd [#allocation3], %s13
      %s15 = sshll.u32 [#allocation2], 4
      %s16 = int_to_ptr.vmem [resolvable:$true] %s15
      %21 = dma.hbm_to_vmem [thread:$0]  %s0, 256, %s16, [#allocation3], 128, 128, 8
    $region5: #{tpu_custom_call.1} parent=1 // pred_fallthru
      _
    // Predicated region
    $region6: #{tpu_custom_call.1} parent=1 // pred_check
      _
    $region7: #{tpu_custom_call.1} parent=1 // pred_check_branch
      %23 = sbr.rel (0) target = $region9
    $region8: #{tpu_custom_call.1} parent=1 // pred_region
      _
    $region9: #{tpu_custom_call.1} parent=1 // pred_fallthru
      _
    // Predicated region
    $region10: #{tpu_custom_call.1} parent=1 // pred_check
      _
    $region11: #{tpu_custom_call.1} parent=1 // pred_check_branch
      %25 = sbr.rel (0) target = $region13
    $region12: #{tpu_custom_call.1} parent=1 // pred_region
      _
    $region13: #{tpu_custom_call.1} parent=1 // pred_fallthru
      _
    // Predicated region
    $region14: #{tpu_custom_call.1} parent=1 // pred_check
      _
    $region15: #{tpu_custom_call.1} parent=1 // pred_check_branch
      %27 = sbr.rel (0) target = $region17
    $region16: #{tpu_custom_call.1} parent=1 // pred_region
      %28 = dma.done [#allocation3], 256
    $region17: #{tpu_custom_call.1} parent=1 // pred_fallthru
      _
    %v29 = vld [vmem:[#allocation2] sm:$0xff]
    %v30 = vld [vmem:[#allocation2 + $0x8] sm:$0xff]
    %31 = vadd.xlane.f32.xlu0 %v29
    %v32 = vpop.xlane.xlu0 %31
    %33 = vadd.xlane.f32.xlu0 %v30
    %v34 = vpop.xlane.xlu0 %33
    %v35 = vmul.f32 %v29, %v29
    %v36 = vmul.f32 %v30, %v30
    %37 = vadd.xlane.f32.xlu0 %v35
    %v38 = vpop.xlane.xlu0 %37
    %39 = vadd.xlane.f32.xlu0 %v36
    %v40 = vpop.xlane.xlu0 %39
    %v41 = vmul.f32 %v32, 0.0078125
    %v42 = vmul.f32 %v34, 0.0078125
    %v43 = vmul.f32 %v32, %v41
    %v44 = vmul.f32 %v34, %v42
    %v45 = vsub.f32 %v38, %v43
    %v46 = vsub.f32 %v40, %v44
    %v47 = vmul.f32 %v45, 0.007874016
    %v48 = vmul.f32 %v46, 0.007874016
    %v49 = vmax.f32 %v47, 0.0
    %v50 = vmax.f32 %v48, 0.0
    %v51 = vrsqrt.pop %v49
    %v52 = vmul.f32 %v49, %v51
    %vm53 = vcmp.eq.f32.partialorder %v49, inf
    %v54 = vsel %vm53, %v49, %v52
    %vm55 = vcmp.eq.f32.partialorder %v49, 0.0
    %v56 = vand.u32 %v49, 2147483648
    %v57 = vsel %vm55, %v56, %v54
    %v58 = vrsqrt.pop %v50
    %v59 = vmul.f32 %v50, %v58
    %vm60 = vcmp.eq.f32.partialorder %v50, inf
    %v61 = vsel %vm60, %v50, %v59
    %vm62 = vcmp.eq.f32.partialorder %v50, 0.0
    %v63 = vand.u32 %v50, 2147483648
    %v64 = vsel %vm62, %v63, %v61
    %v65 = vadd.f32 %v57, 1e-07
    %v66 = vadd.f32 %v64, 1e-07
    %v67 = vrcp.pop %v65
    %v68 = vrcp.pop %v66
    %v69 = vld [vmem:[%s1] sm:$0x1]
    %v70 = vsub.f32 %v29, %v41
    %v71 = vsub.f32 %v30, %v42
    %v72 = vmul.f32 %v70, %v67
    %v73 = vmul.f32 %v71, %v68
    %v75 = vlaneseq
    %v76 = vshrl.u32 %v75, 7
    %v77 = vsub.s32 0, %v76
    %v78 = vrot.slane %v69, %v77
    %v80 = vmul.f32 %v78, %v72
    %v81 = vmul.f32 %v78, %v73
    %v82 = vld [vmem:[%s2] sm:$0x1]
    %v84 = vlaneseq
    %v85 = vshrl.u32 %v84, 7
    %v86 = vsub.s32 0, %v85
    %v87 = vrot.slane %v82, %v86
    %v89 = vadd.f32 %v80, %v87
    %v90 = vadd.f32 %v81, %v87
    %91 = vst [vmem:[#allocation5] sm:$0xff] %v89
    %92 = vst [vmem:[#allocation5 + $0x8] sm:$0xff] %v90
    // Predicated region
    $region18: #{tpu_custom_call.1} parent=1 // pred_check
      _
    $region19: #{tpu_custom_call.1} parent=1 // pred_check_branch
      %94 = sbr.rel (0) target = $region21
    $region20: #{tpu_custom_call.1} parent=1 // pred_region
      %s96 = ssub.s32 256, 256
      %97 = vsyncadd [#allocation4], %s96
      %s98 = sshll.u32 [#allocation5], 4
      %s99 = int_to_ptr.vmem [resolvable:$true] %s98
      %104 = dma.vmem_to_hbm [thread:$0]  %s99, 256, %s3, [#allocation4], 128, 128, 8
    $region21: #{tpu_custom_call.1} parent=1 // pred_fallthru
      _
    // Predicated region
    $region22: #{tpu_custom_call.1} parent=1 // pred_check
      _
    $region23: #{tpu_custom_call.1} parent=1 // pred_check_branch
      %106 = sbr.rel (0) target = $region25
    $region24: #{tpu_custom_call.1} parent=1 // pred_region
      %107 = dma.done [#allocation4], 256
    $region25: #{tpu_custom_call.1} parent=1 // pred_fallthru
      _
    %108 = vsyncpa [#allocation3], 1
    %109 = vsyncpa [#allocation4], 1

</llo_original>
